<compile_context>
chip_gen: v5e
topology: v5e:2x2
jax: 0.10.0
libtpu: 0.0.40
codegen_flags: <defaults>
</compile_context>

<pallas_src>
import functools

import jax
import jax.numpy as jnp
from jax.experimental import pallas as pl
from jax.experimental.pallas import tpu as pltpu

LANE = 128
SUBLANE_BF16 = 16  # bf16 packs 2 rows/sublane -> native (16, 128) tile


def _round_up(x, m):
    return (x + m - 1) // m * m


def _vmem_budget_bytes():
    """Generation-aware VMEM budget (~75% of physical capacity)."""
    cap = None
    try:
        info = pltpu.get_tpu_info()
        cap = getattr(info, "vmem_capacity_bytes", None)
    except Exception:  # query unavailable -> assume the smallest generation
        cap = None
    if not cap:
        cap = 64 * 2 ** 20  # v7x has the smallest per-core VMEM (64 MiB)
    return int(cap) * 3 // 4


def time_embedding_kernel(t_ref, w1_ref, b1_ref, w2t_ref, b2_ref, o_ref):
    # t_ref   : (B_p, 1)      f32   resident full timestep column (fp16-rounded)
    # w1_ref  : (1, dim_p)    f32   W1^T row (fp16-rounded), resident
    # b1_ref  : (1, dim_p)    f32   resident
    # w2t_ref : (dim_p, tn)   bf16  W2^T column block, resident across batch steps
    # b2_ref  : (1, tn)       bf16  resident
    # o_ref   : (tm, tn)      bf16
    tm = o_ref.shape[0]
    row0 = pl.multiple_of(pl.program_id(1) * tm, tm)      # batch axis is grid dim 1
    t = t_ref[pl.ds(row0, tm), :]                          # (tm, 1) f32

    # Linear(1, dim): in_features == 1 -> broadcasted scale + bias (VPU, f32).
    h = jnp.sin(t * w1_ref[...] + b1_ref[...])             # (tm, dim_p) f32

    # Linear(dim, dim): bf16 x bf16 MXU matmul, f32 accumulation.
    acc = jnp.dot(h.astype(jnp.bfloat16), w2t_ref[...],
                  preferred_element_type=jnp.float32)      # (tm, tn) f32
    acc = acc + b2_ref[...].astype(jnp.float32)
    o_ref[...] = acc.astype(o_ref.dtype)                   # 16-bit writeback


def prepare_time_embedding_params(w1, b1, w2, b2):
    """One-time parameter preprocessing (hoisted out of the per-call hot path)."""
    dim = w1.shape[0]
    dim_p = _round_up(dim, LANE)
    pad = dim_p - dim

    # First linear: fp16-round (half semantics) but keep f32 storage -- tiny,
    # and sin(t * w1 + b1) with large t is sensitive to operand rounding.
    w1_row = w1.astype(jnp.float16).astype(jnp.float32).reshape(1, dim)
    b1_row = b1.astype(jnp.float16).astype(jnp.float32).reshape(1, dim)
    # Second linear: transpose once, ship 16-bit (bf16) to halve weight DMA bytes.
    w2_t = w2.T.astype(jnp.bfloat16)                       # (dim, dim)
    b2_row = b2.astype(jnp.bfloat16).reshape(1, dim)

    if pad:  # lane-dense feature axis; zero padding is an exact no-op
        w1_row = jnp.pad(w1_row, ((0, 0), (0, pad)))
        b1_row = jnp.pad(b1_row, ((0, 0), (0, pad)))
        w2_t = jnp.pad(w2_t, ((0, pad), (0, pad)))
        b2_row = jnp.pad(b2_row, ((0, 0), (0, pad)))

    return {"dim": dim, "dim_p": dim_p,
            "w1_row": w1_row, "b1_row": b1_row,
            "w2_t": w2_t, "b2_row": b2_row}


def _run_pallas(t_in, w1_row, b1_row, w2_t, b2_row, *, dim_p, tn, tm, B_p,
                vmem_limit, single_buffer_resident):
    nj = dim_p // tn     # output-feature blocks (outer, parallel)
    ni = B_p // tm       # batch blocks (inner, parallel)
    res = {"pipeline_mode": pl.Buffered(1)} if single_buffer_resident else {}

    in_specs = [
        pl.BlockSpec((B_p, 1),    lambda j, i: (0, 0), **res),   # t column, resident
        pl.BlockSpec((1, dim_p),  lambda j, i: (0, 0), **res),   # w1 row, resident
        pl.BlockSpec((1, dim_p),  lambda j, i: (0, 0), **res),   # b1 row, resident
        pl.BlockSpec((dim_p, tn), lambda j, i: (0, j), **res),   # bf16 W2^T block
        pl.BlockSpec((1, tn),     lambda j, i: (0, j), **res),   # b2 block
    ]
    out_specs = pl.BlockSpec((tm, tn), lambda j, i: (i, j))

    # jnp.sin lowers to a VPU range-reduction + polynomial (not EUP): count it
    # as ~24 flops/element instead of a transcendental.
    sin_flops = 24
    cost = pl.CostEstimate(
        flops=2 * B_p * dim_p * dim_p + (3 + sin_flops) * B_p * dim_p,
        transcendentals=0,
        bytes_accessed=int(4 * B_p + 8 * dim_p + 2 * dim_p * dim_p + 2 * dim_p
                           + 2 * B_p * dim_p),
    )

    return pl.pallas_call(
        time_embedding_kernel,
        out_shape=jax.ShapeDtypeStruct((B_p, dim_p), jnp.bfloat16),
        grid=(nj, ni),
        in_specs=in_specs,
        out_specs=out_specs,
        compiler_params=pltpu.CompilerParams(
            dimension_semantics=("parallel", "parallel"),
            vmem_limit_bytes=int(vmem_limit),
        ),
        cost_estimate=cost,
    )(t_in, w1_row, b1_row, w2_t, b2_row)


def time_embedding(t, params):
    """t: (B,) float timesteps; params from prepare_time_embedding_params."""
    dim, dim_p = params["dim"], params["dim_p"]
    w1_row, b1_row = params["w1_row"], params["b1_row"]
    w2_t, b2_row = params["w2_t"], params["b2_row"]

    # t.float().view(-1, 1).half(): keep fp16 rounding of t (changes sin arg),
    # single upcast to f32 for the in-kernel elementwise math.
    t_in = (jnp.asarray(t).astype(jnp.float32).reshape(-1, 1)
            .astype(jnp.float16).astype(jnp.float32))
    B = t_in.shape[0]

    budget = _vmem_budget_bytes()

    # N split only when the resident bf16 weight block is large vs. the budget
    # (needed for dim >= ~4k on v7x's 64 MiB VMEM); tn stays a multiple of 128.
    nj = 1
    while (2 * dim_p * (dim_p // nj) > budget // 2
           and (dim_p // (2 * nj)) % LANE == 0):
        nj *= 2
    tn = dim_p // nj

    # Batch tile: as large as VMEM allows (amortize ~0.35 us/step overhead),
    # multiple of 16 so bf16 output stores stay on the dense (16,128) path.
    tm = min(512, _round_up(max(B, 1), SUBLANE_BF16))

    def vmem_need(tm_):
        B_p_ = _round_up(B, tm_)
        return (4 * B_p_               # resident t column (f32)
                + 8 * dim_p            # w1 + b1 rows (f32)
                + 2 * dim_p * tn       # W2^T block (bf16, single-buffered)
                + 2 * tn               # b2 row (bf16)
                + 2 * (2 * tm_ * tn))  # output tile, double-buffered bf16

    while tm > SUBLANE_BF16 and vmem_need(tm) > budget:
        tm = max(SUBLANE_BF16, _round_up(tm // 2, SUBLANE_BF16))
    B_p = _round_up(B, tm)
    if B_p != B:
        t_in = jnp.pad(t_in, ((0, B_p - B), (0, 0)))

    # Megacore (v7x): if the batch grid degenerates to one step (tiny B, the
    # common diffusion case), split N once so a 2nd TensorCore gets work.
    if (B_p // tm == 1 and nj == 1 and dim_p >= 2 * LANE
            and (dim_p // 2) % LANE == 0):
        nj, tn = 2, dim_p // 2

    run = functools.partial(_run_pallas, t_in, w1_row, b1_row, w2_t, b2_row,
                            dim_p=dim_p, tn=tn, tm=tm, B_p=B_p,
                            vmem_limit=budget)
    try:
        # Preferred path: resident operands single-buffered (halves the
        # dominant weight VMEM allocation).
        out = jax.block_until_ready(run(single_buffer_resident=True))
    except Exception:
        # pipeline_mode support varies across JAX versions; default
        # double-buffering is the previously verified, correct fallback.
        out = run(single_buffer_resident=False)

    # Strip batch/feature padding; output stays 16-bit (bf16 = TPU half).
    return out[:B, :dim]


def _init_params(key, dim):
    # Deterministic nn.Linear-style init: U(-1/sqrt(fan_in), 1/sqrt(fan_in))
    k1, k2, k3, k4 = jax.random.split(key, 4)
    bound1 = 1.0  # fan_in = 1
    w1 = jax.random.uniform(k1, (dim, 1), jnp.float32, -bound1, bound1)
    b1 = jax.random.uniform(k2, (dim,), jnp.float32, -bound1, bound1)
    bound2 = 1.0 / float(jnp.sqrt(dim))
    w2 = jax.random.uniform(k3, (dim, dim), jnp.float32, -bound2, bound2)
    b2 = jax.random.uniform(k4, (dim,), jnp.float32, -bound2, bound2)
    return w1, b1, w2, b2


if __name__ == "__main__":
    dim = 32
    B = 8
    key = jax.random.PRNGKey(0)
    kp, kt = jax.random.split(key)
    w1, b1, w2, b2 = _init_params(kp, dim)
    t = jax.random.uniform(kt, (B,), jnp.float32, 0.0, 1000.0)  # diffusion timesteps

    params = prepare_time_embedding_params(w1, b1, w2, b2)      # one-time prep
    out = time_embedding(t, params)
    out = jax.block_until_ready(out)

    # Reference: PyTorch-half-style math (fp16-rounded operands, f32 accumulate).
    t16 = t.reshape(-1, 1).astype(jnp.float16).astype(jnp.float32)
    w1h = w1.astype(jnp.float16).astype(jnp.float32)
    b1h = b1.astype(jnp.float16).astype(jnp.float32)
    h_ref = jnp.sin(t16 @ w1h.T + b1h)
    o_ref = (h_ref @ w2.astype(jnp.float16).astype(jnp.float32).T
             + b2.astype(jnp.float16).astype(jnp.float32))

    assert out.shape == (B, dim) and out.dtype == jnp.bfloat16
    # bf16 operands / bf16 output vs fp16-emulated reference: small rounding gap.
    assert jnp.allclose(out.astype(jnp.float32), o_ref, atol=5e-2, rtol=5e-2)
    print("KERNEL_OK")
</pallas_src>

<mosaic_0001>
module attributes {stable_mosaic.version = 11 : i64} {
  func.func @time_embedding_kernel(%arg0: i32, %arg1: i32, %arg2: memref<16x1xf32, #tpu.memory_space<vmem>>, %arg3: memref<1x128xf32, #tpu.memory_space<vmem>>, %arg4: memref<1x128xf32, #tpu.memory_space<vmem>>, %arg5: memref<128x128xbf16, #tpu.memory_space<vmem>>, %arg6: memref<1x128xbf16, #tpu.memory_space<vmem>>, %arg7: memref<16x128xbf16, #tpu.memory_space<vmem>>) attributes {dimension_semantics = [#tpu.dimension_semantics<parallel>, #tpu.dimension_semantics<parallel>], iteration_bounds = array<i64: 1, 1>, scalar_prefetch = 0 : i64, scratch_operands = 0 : i64, tpu.core_type = #tpu.core_type<tc>, window_params = [{pipeline_mode = #tpu.pipeline_mode<synchronous>, transform_indices = @transform_0, window_bounds = array<i64: 16, 1>}, {pipeline_mode = #tpu.pipeline_mode<synchronous>, transform_indices = @transform_1, window_bounds = array<i64: 1, 128>}, {pipeline_mode = #tpu.pipeline_mode<synchronous>, transform_indices = @transform_2, window_bounds = array<i64: 1, 128>}, {pipeline_mode = #tpu.pipeline_mode<synchronous>, transform_indices = @transform_3, window_bounds = array<i64: 128, 128>}, {pipeline_mode = #tpu.pipeline_mode<synchronous>, transform_indices = @transform_4, window_bounds = array<i64: 1, 128>}, {transform_indices = @transform_5, window_bounds = array<i64: 16, 128>}]} {
    %c16_i32 = arith.constant 16 : i32
    %0 = arith.muli %arg1, %c16_i32 : i32
    %1 = tpu.assume_multiple %0, 16 : i32
    %2 = arith.index_cast %1 : i32 to index
    %c0 = arith.constant 0 : index
    %3 = vector.load %arg2[%2, %c0] : memref<16x1xf32, #tpu.memory_space<vmem>>, vector<16x1xf32>
    %c0_0 = arith.constant 0 : index
    %c0_1 = arith.constant 0 : index
    %4 = vector.load %arg3[%c0_0, %c0_1] : memref<1x128xf32, #tpu.memory_space<vmem>>, vector<1x128xf32>
    %5 = vector.broadcast %3 : vector<16x1xf32> to vector<16x128xf32>
    %6 = vector.broadcast %4 : vector<1x128xf32> to vector<16x128xf32>
    %7 = arith.mulf %5, %6 : vector<16x128xf32>
    %c0_2 = arith.constant 0 : index
    %c0_3 = arith.constant 0 : index
    %8 = vector.load %arg4[%c0_2, %c0_3] : memref<1x128xf32, #tpu.memory_space<vmem>>, vector<1x128xf32>
    %9 = vector.broadcast %8 : vector<1x128xf32> to vector<16x128xf32>
    %10 = arith.addf %7, %9 : vector<16x128xf32>
    %11 = math.sin %10 : vector<16x128xf32>
    %12 = arith.truncf %11 : vector<16x128xf32> to vector<16x128xbf16>
    %c0_4 = arith.constant 0 : index
    %c0_5 = arith.constant 0 : index
    %13 = vector.load %arg5[%c0_4, %c0_5] : memref<128x128xbf16, #tpu.memory_space<vmem>>, vector<128x128xbf16>
    %cst = arith.constant dense<0.000000e+00> : vector<16x128xf32>
    %14 = tpu.matmul %12, %13, %cst {dimension_numbers = #tpu.dot_dimension_numbers<[1], [0], [0], [1], [0, 0, 1, 1], [], []>} : vector<16x128xbf16>, vector<128x128xbf16>, vector<16x128xf32> -> vector<16x128xf32>
    %c0_6 = arith.constant 0 : index
    %c0_7 = arith.constant 0 : index
    %15 = vector.load %arg6[%c0_6, %c0_7] : memref<1x128xbf16, #tpu.memory_space<vmem>>, vector<1x128xbf16>
    %16 = arith.extf %15 : vector<1x128xbf16> to vector<1x128xf32>
    %17 = vector.broadcast %16 : vector<1x128xf32> to vector<16x128xf32>
    %18 = arith.addf %14, %17 : vector<16x128xf32>
    %19 = arith.truncf %18 : vector<16x128xf32> to vector<16x128xbf16>
    %c0_8 = arith.constant 0 : index
    %c0_9 = arith.constant 0 : index
    %20 = vector.load %arg7[%c0_8, %c0_9] : memref<16x128xbf16, #tpu.memory_space<vmem>>, vector<16x128xbf16>
    tpu.vector_store %arg7[%c0_8, %c0_9], %19 {strides = array<i32>} : memref<16x128xbf16, #tpu.memory_space<vmem>>, vector<16x128xbf16>,
    return
  }
  func.func @transform_0(%arg0: i32, %arg1: i32) -> (i32, i32) {
    %c0_i32 = arith.constant 0 : i32
    %c0_i32_0 = arith.constant 0 : i32
    %c0_i32_1 = arith.constant 0 : i32
    return %c0_i32, %c0_i32_0 : i32, i32
  }
  func.func @transform_1(%arg0: i32, %arg1: i32) -> (i32, i32) {
    %c0_i32 = arith.constant 0 : i32
    %c0_i32_0 = arith.constant 0 : i32
    %c0_i32_1 = arith.constant 0 : i32
    return %c0_i32, %c0_i32_0 : i32, i32
  }
  func.func @transform_2(%arg0: i32, %arg1: i32) -> (i32, i32) {
    %c0_i32 = arith.constant 0 : i32
    %c0_i32_0 = arith.constant 0 : i32
    %c0_i32_1 = arith.constant 0 : i32
    return %c0_i32, %c0_i32_0 : i32, i32
  }
  func.func @transform_3(%arg0: i32, %arg1: i32) -> (i32, i32) {
    %c0_i32 = arith.constant 0 : i32
    %c0_i32_0 = arith.constant 0 : i32
    return %c0_i32, %arg0 : i32, i32
  }
  func.func @transform_4(%arg0: i32, %arg1: i32) -> (i32, i32) {
    %c0_i32 = arith.constant 0 : i32
    %c0_i32_0 = arith.constant 0 : i32
    return %c0_i32, %arg0 : i32, i32
  }
  func.func @transform_5(%arg0: i32, %arg1: i32) -> (i32, i32) {
    %c0_i32 = arith.constant 0 : i32
    return %arg1, %arg0 : i32, i32
  }
}

module attributes {stable_mosaic.version = 11 : i64} {
  func.func @time_embedding_kernel(%arg0: i32, %arg1: i32, %arg2: memref<16x1xf32, #tpu.memory_space<vmem>>, %arg3: memref<1x128xf32, #tpu.memory_space<vmem>>, %arg4: memref<1x128xf32, #tpu.memory_space<vmem>>, %arg5: memref<128x128xbf16, #tpu.memory_space<vmem>>, %arg6: memref<1x128xbf16, #tpu.memory_space<vmem>>, %arg7: memref<16x128xbf16, #tpu.memory_space<vmem>>) attributes {dimension_semantics = [#tpu.dimension_semantics<parallel>, #tpu.dimension_semantics<parallel>], iteration_bounds = array<i64: 1, 1>, scalar_prefetch = 0 : i64, scratch_operands = 0 : i64, tpu.core_type = #tpu.core_type<tc>, window_params = [{pipeline_mode = #tpu.pipeline_mode<synchronous>, transform_indices = @transform_0, window_bounds = array<i64: 16, 1>}, {pipeline_mode = #tpu.pipeline_mode<synchronous>, transform_indices = @transform_1, window_bounds = array<i64: 1, 128>}, {pipeline_mode = #tpu.pipeline_mode<synchronous>, transform_indices = @transform_2, window_bounds = array<i64: 1, 128>}, {transform_indices = @transform_3, window_bounds = array<i64: 128, 128>}, {transform_indices = @transform_4, window_bounds = array<i64: 1, 128>}, {transform_indices = @transform_5, window_bounds = array<i64: 16, 128>}]} {
    %c16_i32 = arith.constant 16 : i32
    %0 = arith.muli %arg1, %c16_i32 : i32
    %1 = tpu.assume_multiple %0, 16 : i32
    %2 = arith.index_cast %1 : i32 to index
    %c0 = arith.constant 0 : index
    %3 = vector.load %arg2[%2, %c0] : memref<16x1xf32, #tpu.memory_space<vmem>>, vector<16x1xf32>
    %c0_0 = arith.constant 0 : index
    %c0_1 = arith.constant 0 : index
    %4 = vector.load %arg3[%c0_0, %c0_1] : memref<1x128xf32, #tpu.memory_space<vmem>>, vector<1x128xf32>
    %5 = vector.broadcast %3 : vector<16x1xf32> to vector<16x128xf32>
    %6 = vector.broadcast %4 : vector<1x128xf32> to vector<16x128xf32>
    %7 = arith.mulf %5, %6 : vector<16x128xf32>
    %c0_2 = arith.constant 0 : index
    %c0_3 = arith.constant 0 : index
    %8 = vector.load %arg4[%c0_2, %c0_3] : memref<1x128xf32, #tpu.memory_space<vmem>>, vector<1x128xf32>
    %9 = vector.broadcast %8 : vector<1x128xf32> to vector<16x128xf32>
    %10 = arith.addf %7, %9 : vector<16x128xf32>
    %11 = math.sin %10 : vector<16x128xf32>
    %12 = arith.truncf %11 : vector<16x128xf32> to vector<16x128xbf16>
    %c0_4 = arith.constant 0 : index
    %c0_5 = arith.constant 0 : index
    %13 = vector.load %arg5[%c0_4, %c0_5] : memref<128x128xbf16, #tpu.memory_space<vmem>>, vector<128x128xbf16>
    %cst = arith.constant dense<0.000000e+00> : vector<16x128xf32>
    %14 = tpu.matmul %12, %13, %cst {dimension_numbers = #tpu.dot_dimension_numbers<[1], [0], [0], [1], [0, 0, 1, 1], [], []>} : vector<16x128xbf16>, vector<128x128xbf16>, vector<16x128xf32> -> vector<16x128xf32>
    %c0_6 = arith.constant 0 : index
    %c0_7 = arith.constant 0 : index
    %15 = vector.load %arg6[%c0_6, %c0_7] : memref<1x128xbf16, #tpu.memory_space<vmem>>, vector<1x128xbf16>
    %16 = arith.extf %15 : vector<1x128xbf16> to vector<1x128xf32>
    %17 = vector.broadcast %16 : vector<1x128xf32> to vector<16x128xf32>
    %18 = arith.addf %14, %17 : vector<16x128xf32>
    %19 = arith.truncf %18 : vector<16x128xf32> to vector<16x128xbf16>
    %c0_8 = arith.constant 0 : index
    %c0_9 = arith.constant 0 : index
    %20 = vector.load %arg7[%c0_8, %c0_9] : memref<16x128xbf16, #tpu.memory_space<vmem>>, vector<16x128xbf16>
    tpu.vector_store %arg7[%c0_8, %c0_9], %19 {strides = array<i32>} : memref<16x128xbf16, #tpu.memory_space<vmem>>, vector<16x128xbf16>,
    return
  }
  func.func @transform_0(%arg0: i32, %arg1: i32) -> (i32, i32) {
    %c0_i32 = arith.constant 0 : i32
    %c0_i32_0 = arith.constant 0 : i32
    %c0_i32_1 = arith.constant 0 : i32
    return %c0_i32, %c0_i32_0 : i32, i32
  }
  func.func @transform_1(%arg0: i32, %arg1: i32) -> (i32, i32) {
    %c0_i32 = arith.constant 0 : i32
    %c0_i32_0 = arith.constant 0 : i32
    %c0_i32_1 = arith.constant 0 : i32
    return %c0_i32, %c0_i32_0 : i32, i32
  }
  func.func @transform_2(%arg0: i32, %arg1: i32) -> (i32, i32) {
    %c0_i32 = arith.constant 0 : i32
    %c0_i32_0 = arith.constant 0 : i32
    %c0_i32_1 = arith.constant 0 : i32
    return %c0_i32, %c0_i32_0 : i32, i32
  }
  func.func @transform_3(%arg0: i32, %arg1: i32) -> (i32, i32) {
    %c0_i32 = arith.constant 0 : i32
    %c0_i32_0 = arith.constant 0 : i32
    return %c0_i32, %arg0 : i32, i32
  }
  func.func @transform_4(%arg0: i32, %arg1: i32) -> (i32, i32) {
    %c0_i32 = arith.constant 0 : i32
    %c0_i32_0 = arith.constant 0 : i32
    return %c0_i32, %arg0 : i32, i32
  }
  func.func @transform_5(%arg0: i32, %arg1: i32) -> (i32, i32) {
    %c0_i32 = arith.constant 0 : i32
    return %arg1, %arg0 : i32, i32
  }
}

</mosaic_0001>

<llo_original>
// kernel: tpu_custom_call.1
$region0: #{tpu_custom_call.1}
  #allocation0 [shape = 'u32[]', space=smem, size = 0x4, offset = 0x4, fixed_abs, tag = 'smem constant byte address 0x4 - core index']
  #allocation1 [shape = 'u32[72,128]{1,0:T(1,128)}', space=vmem, size = 0x9000, scoped, tag = 'internal scratch']
  %s0 = inlined_call_operand.vmem [shape: f32[16,1], index: 0, kind: input, shape index: {}]
  %s1 = inlined_call_operand.vmem [shape: f32[1,128], index: 1, kind: input, shape index: {}]
  %s2 = inlined_call_operand.vmem [shape: f32[1,128], index: 2, kind: input, shape index: {}]
  %s3 = inlined_call_operand.hbm [shape: bf16[128,128], index: 3, kind: input, shape index: {}]
  %s4 = inlined_call_operand.vmem [shape: bf16[1,128], index: 4, kind: input, shape index: {}]
  %s5 = inlined_call_operand.hbm [shape: bf16[16,128], index: 5, kind: output, shape index: {}]
  %s6 = sld [smem:[#allocation0]]
  $region34: #{tpu_custom_call.1} parent=0
    _
  %s8 = ssub.s32 1, %s6
  %s9 = scalar_select 0, %s8, %s6
  $region1: #{tpu_custom_call.1} parent=0
    #allocation2 [shape = 'u8[32768]{0}', space=vmem, size = 0x8000, scoped, tag = 'input window, operand 3, single buffered']
    #allocation3 [shape = 's32[1]{0}', space=sflag, size = 0x4, scoped, tag = 'scoped memory for tpu_custom_call.1']
    #allocation4 [shape = 's32[1]{0}', space=sflag, size = 0x4, scoped, tag = 'scoped memory for tpu_custom_call.1']
    #allocation5 [shape = 'u8[4096]{0}', space=vmem, size = 0x1000, scoped, tag = 'output window, operand 0, single buffered']
    %10 = vsyncpa [#allocation3], 0
    %11 = vsyncpa [#allocation4], 0
    // Predicated region
    $region2: #{tpu_custom_call.1} parent=1 // pred_check
      _
    $region3: #{tpu_custom_call.1} parent=1 // pred_check_branch
      %13 = sbr.rel (0) target = $region5
    $region4: #{tpu_custom_call.1} parent=1 // pred_region
      _
    $region5: #{tpu_custom_call.1} parent=1 // pred_fallthru
      _
    // Predicated region
    $region6: #{tpu_custom_call.1} parent=1 // pred_check
      _
    $region7: #{tpu_custom_call.1} parent=1 // pred_check_branch
      %15 = sbr.rel (0) target = $region9
    $region8: #{tpu_custom_call.1} parent=1 // pred_region
      _
    $region9: #{tpu_custom_call.1} parent=1 // pred_fallthru
      _
    // Predicated region
    $region10: #{tpu_custom_call.1} parent=1 // pred_check
      _
    $region11: #{tpu_custom_call.1} parent=1 // pred_check_branch
      %17 = sbr.rel (0) target = $region13
    $region12: #{tpu_custom_call.1} parent=1 // pred_region
      _
    $region13: #{tpu_custom_call.1} parent=1 // pred_fallthru
      _
    // Predicated region
    $region14: #{tpu_custom_call.1} parent=1 // pred_check
      _
    $region15: #{tpu_custom_call.1} parent=1 // pred_check_branch
      %19 = sbr.rel (0) target = $region17
    $region16: #{tpu_custom_call.1} parent=1 // pred_region
      %21 = vsyncadd [#allocation3], 0
      %s22 = sshll.u32 %s3, 4
      %s23 = int_to_ptr.hbm [resolvable:$true] %s22
      %s24 = sshll.u32 [#allocation2], 4
      %s25 = int_to_ptr.vmem [resolvable:$true] %s24
      %30 = dma.hbm_to_vmem [thread:$0]  %s23, 1024, %s25, [#allocation3], 64, 64, 4
    $region17: #{tpu_custom_call.1} parent=1 // pred_fallthru
      _
    // Predicated region
    $region18: #{tpu_custom_call.1} parent=1 // pred_check
      _
    $region19: #{tpu_custom_call.1} parent=1 // pred_check_branch
      %32 = sbr.rel (0) target = $region21
    $region20: #{tpu_custom_call.1} parent=1 // pred_region
      _
    $region21: #{tpu_custom_call.1} parent=1 // pred_fallthru
      _
    // Predicated region
    $region22: #{tpu_custom_call.1} parent=1 // pred_check
      _
    $region23: #{tpu_custom_call.1} parent=1 // pred_check_branch
      %34 = sbr.rel (0) target = $region25
    $region24: #{tpu_custom_call.1} parent=1 // pred_region
      %36 = dma.done [#allocation3], 1024
    $region25: #{tpu_custom_call.1} parent=1 // pred_fallthru
      _
    %s37 = smul.u32 0, 16
    %s38 = scalar_lea.vmem %s0, %s37
    %v39 = vld [vmem:[%s38] sm:$0xff]
    %v40 = vld [vmem:[%s38 + $0x8] sm:$0xff]
    %v41 = vld [vmem:[%s1] sm:$0x1]
    %43 = vset.pattern.permute.xlu0 0
    %44 = vperm.xlu0 %43, %v39
    %v45 = vpop.permute.xlu0 %44
    %48 = vset.pattern.permute.xlu0 0
    %49 = vperm.xlu0 %48, %v40
    %v50 = vpop.permute.xlu0 %49
    %v53 = vperm.slane %v41, 0
    %v55 = vmul.f32 %v45, %v53
    %v56 = vmul.f32 %v50, %v53
    %v57 = vld [vmem:[%s2] sm:$0x1]
    %v59 = vperm.slane %v57, 0
    %v61 = vadd.f32 %v55, %v59
    %v62 = vadd.f32 %v56, %v59
    %v63 = vand.u32 2147483647, %v61
    %vm64 = vcmp.le.f32.partialorder %v63, 0.7853982
    %vm65 = vcmp.lt.s32.totalorder %v61, 0
    %v66 = vand.u32 %v61, 2139095040
    %v67 = vshrl.u32 %v66, 23
    %v68 = vsub.s32 %v67, 127
    %v69 = vand.u32 2147483647, %v61
    %v70 = vand.u32 %v69, 8388607
    %v71 = vor.u32 %v70, 8388608
    %v72 = vsub.s32 0, %v71
    %v73 = vadd.s32 %v68, 1
    %vm74 = vcmp.gt.s32.totalorder %v73, 0
    %v75 = vsel %vm74, %v73, 0
    %v76 = vshrl.u32 %v75, 5
    %v77 = vand.u32 %v75, 31
    %v78 = vsub.s32 32, %v77
    %v79 = vshrl.u32 683565275, %v78
    %v80 = vshll.u32 683565275, %v77
    %v81 = vshrl.u32 2475754826, %v78
    %v82 = vor.u32 %v80, %v81
    %v83 = vshll.u32 2475754826, %v77
    %v84 = vshrl.u32 2131351028, %v78
    %v85 = vor.u32 %v83, %v84
    %v86 = vshll.u32 2131351028, %v77
    %v87 = vshrl.u32 2102212464, %v78
    %v88 = vor.u32 %v86, %v87
    %v89 = vshll.u32 2102212464, %v77
    %v90 = vshrl.u32 920167782, %v78
    %v91 = vor.u32 %v89, %v90
    %v92 = vshll.u32 920167782, %v77
    %v93 = vshrl.u32 1326507024, %v78
    %v94 = vor.u32 %v92, %v93
    %vm95 = vcmp.lt.s32.totalorder %v76, 1
    %vm96 = vcmp.lt.s32.totalorder %v76, 2
    %vm97 = vcmp.lt.s32.totalorder %v76, 3
    %vm98 = vcmp.lt.s32.totalorder %v76, 4
    %v99 = vsel %vm95, %v79, %v82
    %v100 = vsel %vm98, %v88, 2102212464
    %v101 = vsel %vm97, %v85, %v100
    %v102 = vsel %vm96, %v99, %v101
    %v103 = vsel %vm95, %v82, %v85
    %v104 = vsel %vm98, %v91, 920167782
    %v105 = vsel %vm97, %v88, %v104
    %v106 = vsel %vm96, %v103, %v105
    %v107 = vsel %vm95, %v85, %v88
    %v108 = vsel %vm98, %v94, 1326507024
    %v109 = vsel %vm97, %v91, %v108
    %v110 = vsel %vm96, %v107, %v109
    %v111 = vshll.u32 %v71, 8
    %v112 = vand.u32 %v111, 65535
    %v113 = vshrl.u32 %v111, 16
    %v114 = vand.u32 %v110, 65535
    %v115 = vshrl.u32 %v110, 16
    %v116 = vmul.u32 %v112, %v114
    %v117 = vmul.u32 %v112, %v115
    %v118 = vmul.u32 %v113, %v114
    %v119 = vmul.u32 %v113, %v115
    %v120 = vshll.u32 %v117, 16
    %v121 = vshrl.u32 %v117, 16
    %v122 = vshll.u32 %v118, 16
    %v123 = vshrl.u32 %v118, 16
    %vm124 = vc.u32 %v116, %v120
    %v125 = vsel %vm124, 1, 0
    %v126 = vadd.s32 %v116, %v120
    %v127 = vadd.s32 %v119, %v125
    %vm128 = vc.u32 %v126, %v122
    %v129 = vsel %vm128, 1, 0
    %v130 = vadd.s32 %v126, %v122
    %v131 = vadd.s32 %v127, %v129
    %v132 = vadd.s32 %v131, %v121
    %v133 = vadd.s32 %v132, %v123
    %v134 = vand.u32 %v111, 65535
    %v135 = vshrl.u32 %v111, 16
    %v136 = vand.u32 %v106, 65535
    %v137 = vshrl.u32 %v106, 16
    %v138 = vmul.u32 %v134, %v136
    %v139 = vmul.u32 %v134, %v137
    %v140 = vmul.u32 %v135, %v136
    %v141 = vmul.u32 %v135, %v137
    %v142 = vshll.u32 %v139, 16
    %v143 = vshrl.u32 %v139, 16
    %v144 = vshll.u32 %v140, 16
    %v145 = vshrl.u32 %v140, 16
    %vm146 = vc.u32 %v138, %v142
    %v147 = vsel %vm146, 1, 0
    %v148 = vadd.s32 %v138, %v142
    %v149 = vadd.s32 %v141, %v147
    %vm150 = vc.u32 %v148, %v144
    %v151 = vsel %vm150, 1, 0
    %v152 = vadd.s32 %v148, %v144
    %v153 = vadd.s32 %v149, %v151
    %v154 = vadd.s32 %v153, %v143
    %v155 = vadd.s32 %v154, %v145
    %v156 = vmul.u32 %v111, %v102
    %v157 = vadd.s32 %v133, %v152
    %vm158 = vc.u32 %v133, %v152
    %v159 = vadd.s32 %v155, 1
    %v160 = vsel %vm158, %v159, %v155
    %v161 = vadd.s32 %v156, %v160
    %v162 = vadd.s32 %v161, 536870912
    %v163 = vshrl.u32 %v162, 30
    %v164 = vshll.u32 %v163, 30
    %v165 = vsub.s32 %v161, %v164
    %vm166 = vcmp.lt.s32.totalorder %v165, 0
    %v167 = vsub.s32 0, %v165
    %v168 = vsel %vm166, %v167, %v165
    %v169 = vclz %v168
    %v170 = vsub.s32 %v169, 2
    %vm171 = vcmp.gt.s32.totalorder 0, %v170
    %v172 = vsel %vm171, 0, %v170
    %v173 = vsub.s32 32, %v172
    %v174 = vshll.u32 %v165, %v172
    %v175 = vshrl.u32 %v157, %v173
    %v176 = vor.u32 %v174, %v175
    %v177 = vsub.s32 4294967266, %v172
    %v178 = vadd.s32 %v177, 127
    %v179 = vshll.u32 %v178, 23
    %v180 = vor.u32 4788187, %v179
    %v181 = vand.u32 2147483647, %v180
    %v183 = vcvt.s32.f32 %v176
    %v184 = vmul.f32 %v183, %v181
    %v185 = vxor.u32 %v184, 2147483648
    %v186 = vsel %vm65, %v185, %v184
    %v187 = vsub.s32 4, %v163
    %v188 = vsel %vm65, %v187, %v163
    %v189 = vsel %vm64, %v61, %v186
    %v190 = vsel %vm64, 0, %v188
    %v191 = vmul.f32 %v189, %v189
    %v192 = vmul.f32 %v191, -0.001358992
    %v193 = vadd.f32 %v192, 0.041655596
    %v194 = vmul.f32 %v191, %v193
    %v195 = vadd.f32 %v194, -0.4999988
    %v196 = vmul.f32 %v191, %v195
    %v197 = vadd.f32 1.0, %v196
    %v198 = vmul.f32 %v189, %v189
    %v199 = vmul.f32 %v198, -0.00019511016
    %v200 = vadd.f32 %v199, 0.008332121
    %v201 = vmul.f32 %v198, %v200
    %v202 = vadd.f32 %v201, -0.16666654
    %v203 = vmul.f32 %v198, %v202
    %v204 = vadd.f32 %v203, 1.0
    %v205 = vmul.f32 %v204, %v189
    %vm206 = vweird.f32 %v61
    %v207 = vadd.s32 %v190, 3
    %v208 = vand.u32 %v207, 3
    %vm209 = vcmp.lt.s32.totalorder %v208, 2
    %vm210 = vcmp.eq.s32.totalorder %v208, 0
    %v211 = vxor.u32 %v205, 2147483648
    %v212 = vsel %vm210, %v197, %v211
    %vm213 = vcmp.eq.s32.totalorder %v208, 2
    %v214 = vxor.u32 %v197, 2147483648
    %v215 = vsel %vm213, %v214, %v205
    %v216 = vsel %vm209, %v212, %v215
    %v217 = vsel %vm206, nan, %v216
    %v218 = vand.u32 2147483647, %v62
    %vm219 = vcmp.le.f32.partialorder %v218, 0.7853982
    %vm220 = vcmp.lt.s32.totalorder %v62, 0
    %v221 = vand.u32 %v62, 2139095040
    %v222 = vshrl.u32 %v221, 23
    %v223 = vsub.s32 %v222, 127
    %v224 = vand.u32 2147483647, %v62
    %v225 = vand.u32 %v224, 8388607
    %v226 = vor.u32 %v225, 8388608
    %v227 = vsub.s32 0, %v226
    %v228 = vadd.s32 %v223, 1
    %vm229 = vcmp.gt.s32.totalorder %v228, 0
    %v230 = vsel %vm229, %v228, 0
    %v231 = vshrl.u32 %v230, 5
    %v232 = vand.u32 %v230, 31
    %v233 = vsub.s32 32, %v232
    %v234 = vshrl.u32 683565275, %v233
    %v235 = vshll.u32 683565275, %v232
    %v236 = vshrl.u32 2475754826, %v233
    %v237 = vor.u32 %v235, %v236
    %v238 = vshll.u32 2475754826, %v232
    %v239 = vshrl.u32 2131351028, %v233
    %v240 = vor.u32 %v238, %v239
    %v241 = vshll.u32 2131351028, %v232
    %v242 = vshrl.u32 2102212464, %v233
    %v243 = vor.u32 %v241, %v242
    %v244 = vshll.u32 2102212464, %v232
    %v245 = vshrl.u32 920167782, %v233
    %v246 = vor.u32 %v244, %v245
    %v247 = vshll.u32 920167782, %v232
    %v248 = vshrl.u32 1326507024, %v233
    %v249 = vor.u32 %v247, %v248
    %vm250 = vcmp.lt.s32.totalorder %v231, 1
    %vm251 = vcmp.lt.s32.totalorder %v231, 2
    %vm252 = vcmp.lt.s32.totalorder %v231, 3
    %vm253 = vcmp.lt.s32.totalorder %v231, 4
    %v254 = vsel %vm250, %v234, %v237
    %v255 = vsel %vm253, %v243, 2102212464
    %v256 = vsel %vm252, %v240, %v255
    %v257 = vsel %vm251, %v254, %v256
    %v258 = vsel %vm250, %v237, %v240
    %v259 = vsel %vm253, %v246, 920167782
    %v260 = vsel %vm252, %v243, %v259
    %v261 = vsel %vm251, %v258, %v260
    %v262 = vsel %vm250, %v240, %v243
    %v263 = vsel %vm253, %v249, 1326507024
    %v264 = vsel %vm252, %v246, %v263
    %v265 = vsel %vm251, %v262, %v264
    %v266 = vshll.u32 %v226, 8
    %v267 = vand.u32 %v266, 65535
    %v268 = vshrl.u32 %v266, 16
    %v269 = vand.u32 %v265, 65535
    %v270 = vshrl.u32 %v265, 16
    %v271 = vmul.u32 %v267, %v269
    %v272 = vmul.u32 %v267, %v270
    %v273 = vmul.u32 %v268, %v269
    %v274 = vmul.u32 %v268, %v270
    %v275 = vshll.u32 %v272, 16
    %v276 = vshrl.u32 %v272, 16
    %v277 = vshll.u32 %v273, 16
    %v278 = vshrl.u32 %v273, 16
    %vm279 = vc.u32 %v271, %v275
    %v280 = vsel %vm279, 1, 0
    %v281 = vadd.s32 %v271, %v275
    %v282 = vadd.s32 %v274, %v280
    %vm283 = vc.u32 %v281, %v277
    %v284 = vsel %vm283, 1, 0
    %v285 = vadd.s32 %v281, %v277
    %v286 = vadd.s32 %v282, %v284
    %v287 = vadd.s32 %v286, %v276
    %v288 = vadd.s32 %v287, %v278
    %v289 = vand.u32 %v266, 65535
    %v290 = vshrl.u32 %v266, 16
    %v291 = vand.u32 %v261, 65535
    %v292 = vshrl.u32 %v261, 16
    %v293 = vmul.u32 %v289, %v291
    %v294 = vmul.u32 %v289, %v292
    %v295 = vmul.u32 %v290, %v291
    %v296 = vmul.u32 %v290, %v292
    %v297 = vshll.u32 %v294, 16
    %v298 = vshrl.u32 %v294, 16
    %v299 = vshll.u32 %v295, 16
    %v300 = vshrl.u32 %v295, 16
    %vm301 = vc.u32 %v293, %v297
    %v302 = vsel %vm301, 1, 0
    %v303 = vadd.s32 %v293, %v297
    %v304 = vadd.s32 %v296, %v302
    %vm305 = vc.u32 %v303, %v299
    %v306 = vsel %vm305, 1, 0
    %v307 = vadd.s32 %v303, %v299
    %v308 = vadd.s32 %v304, %v306
    %v309 = vadd.s32 %v308, %v298
    %v310 = vadd.s32 %v309, %v300
    %v311 = vmul.u32 %v266, %v257
    %v312 = vadd.s32 %v288, %v307
    %vm313 = vc.u32 %v288, %v307
    %v314 = vadd.s32 %v310, 1
    %v315 = vsel %vm313, %v314, %v310
    %v316 = vadd.s32 %v311, %v315
    %v317 = vadd.s32 %v316, 536870912
    %v318 = vshrl.u32 %v317, 30
    %v319 = vshll.u32 %v318, 30
    %v320 = vsub.s32 %v316, %v319
    %vm321 = vcmp.lt.s32.totalorder %v320, 0
    %v322 = vsub.s32 0, %v320
    %v323 = vsel %vm321, %v322, %v320
    %v324 = vclz %v323
    %v325 = vsub.s32 %v324, 2
    %vm326 = vcmp.gt.s32.totalorder 0, %v325
    %v327 = vsel %vm326, 0, %v325
    %v328 = vsub.s32 32, %v327
    %v329 = vshll.u32 %v320, %v327
    %v330 = vshrl.u32 %v312, %v328
    %v331 = vor.u32 %v329, %v330
    %v332 = vsub.s32 4294967266, %v327
    %v333 = vadd.s32 %v332, 127
    %v334 = vshll.u32 %v333, 23
    %v335 = vor.u32 4788187, %v334
    %v336 = vand.u32 2147483647, %v335
    %v338 = vcvt.s32.f32 %v331
    %v339 = vmul.f32 %v338, %v336
    %v340 = vxor.u32 %v339, 2147483648
    %v341 = vsel %vm220, %v340, %v339
    %v342 = vsub.s32 4, %v318
    %v343 = vsel %vm220, %v342, %v318
    %v344 = vsel %vm219, %v62, %v341
    %v345 = vsel %vm219, 0, %v343
    %v346 = vmul.f32 %v344, %v344
    %v347 = vmul.f32 %v346, -0.001358992
    %v348 = vadd.f32 %v347, 0.041655596
    %v349 = vmul.f32 %v346, %v348
    %v350 = vadd.f32 %v349, -0.4999988
    %v351 = vmul.f32 %v346, %v350
    %v352 = vadd.f32 1.0, %v351
    %v353 = vmul.f32 %v344, %v344
    %v354 = vmul.f32 %v353, -0.00019511016
    %v355 = vadd.f32 %v354, 0.008332121
    %v356 = vmul.f32 %v353, %v355
    %v357 = vadd.f32 %v356, -0.16666654
    %v358 = vmul.f32 %v353, %v357
    %v359 = vadd.f32 %v358, 1.0
    %v360 = vmul.f32 %v359, %v344
    %vm361 = vweird.f32 %v62
    %v362 = vadd.s32 %v345, 3
    %v363 = vand.u32 %v362, 3
    %vm364 = vcmp.lt.s32.totalorder %v363, 2
    %vm365 = vcmp.eq.s32.totalorder %v363, 0
    %v366 = vxor.u32 %v360, 2147483648
    %v367 = vsel %vm365, %v352, %v366
    %vm368 = vcmp.eq.s32.totalorder %v363, 2
    %v369 = vxor.u32 %v352, 2147483648
    %v370 = vsel %vm368, %v369, %v360
    %v371 = vsel %vm364, %v367, %v370
    %v372 = vsel %vm361, nan, %v371
    %v373 = vpack.c.bf16 %v372, %v217
    %v374 = vld [vmem:[#allocation2] sm:$0xf]
    %v375 = vld [vmem:[#allocation2 + $0x4] sm:$0xf]
    %v376 = vld [vmem:[#allocation2 + $0x8] sm:$0xf]
    %v377 = vld [vmem:[#allocation2 + $0xc] sm:$0xf]
    %v378 = vld [vmem:[#allocation2 + $0x10] sm:$0xf]
    %v379 = vld [vmem:[#allocation2 + $0x14] sm:$0xf]
    %v380 = vld [vmem:[#allocation2 + $0x18] sm:$0xf]
    %v381 = vld [vmem:[#allocation2 + $0x1c] sm:$0xf]
    %v382 = vld [vmem:[#allocation2 + $0x20] sm:$0xf]
    %v383 = vld [vmem:[#allocation2 + $0x24] sm:$0xf]
    %v384 = vld [vmem:[#allocation2 + $0x28] sm:$0xf]
    %v385 = vld [vmem:[#allocation2 + $0x2c] sm:$0xf]
    %v386 = vld [vmem:[#allocation2 + $0x30] sm:$0xf]
    %v387 = vld [vmem:[#allocation2 + $0x34] sm:$0xf]
    %v388 = vld [vmem:[#allocation2 + $0x38] sm:$0xf]
    %v389 = vld [vmem:[#allocation2 + $0x3c] sm:$0xf]
    %v390 = vld [vmem:[%s4] sm:$0x1]
    %v391 = vunpack.c.l.bf16 %v390
    %v392 = vperm.slane %v391, 0
    %v409 = vunpack.c.l.b16 %v374
    %v410 = vunpack.c.l.b16 %v375
    %v411 = vunpack.c.l.b16 %v376
    %v412 = vunpack.c.l.b16 %v377
    %v413 = vunpack.c.l.b16 %v378
    %v414 = vunpack.c.l.b16 %v379
    %v415 = vunpack.c.l.b16 %v380
    %v416 = vunpack.c.l.b16 %v381
    %v417 = vunpack.c.l.b16 %v382
    %v418 = vunpack.c.l.b16 %v383
    %v419 = vunpack.c.l.b16 %v384
    %v420 = vunpack.c.l.b16 %v385
    %v421 = vunpack.c.l.b16 %v386
    %v422 = vunpack.c.l.b16 %v387
    %v423 = vunpack.c.l.b16 %v388
    %v424 = vunpack.c.l.b16 %v389
    %v425 = vpack.c.b16 %v410, %v409
    %v426 = vpack.c.b16 %v412, %v411
    %v427 = vpack.c.b16 %v414, %v413
    %v428 = vpack.c.b16 %v416, %v415
    %v429 = vpack.c.b16 %v418, %v417
    %v430 = vpack.c.b16 %v420, %v419
    %v431 = vpack.c.b16 %v422, %v421
    %v432 = vpack.c.b16 %v424, %v423
    %441 = vmatpush.bf16.msra.mxu0 %v432
    %442 = vmatpush.bf16.msra.mxu0 %v431
    %443 = vmatpush.bf16.msra.mxu0 %v430
    %444 = vmatpush.bf16.msra.mxu0 %v429
    %445 = vmatpush.bf16.msra.mxu0 %v428
    %446 = vmatpush.bf16.msra.mxu0 %v427
    %447 = vmatpush.bf16.msra.mxu0 %v426
    %448 = vmatpush.bf16.msra.mxu0 %v425
    %449 = vmatmul.bf16.gmra.mxu0 %v373
    %v450 = vpop.f32.mrf.mxu0
    %v451 = vadd.f32 %v392, %v450
    %v452 = vpop.f32.mrf.mxu0
    %v453 = vadd.f32 %v392, %v452
    %454 = vdwg.mxu0
    %v455 = vpack.c.bf16 %v451, %v451
    %v456 = vpack.c.bf16 %v453, %v453
    %457 = vst [vmem:[#allocation5] sm:$0xf] %v455
    %458 = vst [vmem:[#allocation5 + $0x4] sm:$0xf] %v456
    // Predicated region
    $region26: #{tpu_custom_call.1} parent=1 // pred_check
      _
    $region27: #{tpu_custom_call.1} parent=1 // pred_check_branch
      %460 = sbr.rel (0) target = $region29
    $region28: #{tpu_custom_call.1} parent=1 // pred_region
      %462 = vsyncadd [#allocation4], 0
      %s463 = sshll.u32 [#allocation5], 4
      %s464 = int_to_ptr.vmem [resolvable:$true] %s463
      %s465 = sshll.u32 %s5, 4
      %s466 = int_to_ptr.hbm [resolvable:$true] %s465
      %471 = dma.vmem_to_hbm [thread:$0]  %s464, 128, %s466, [#allocation4], 64, 64, 4
    $region29: #{tpu_custom_call.1} parent=1 // pred_fallthru
      _
    // Predicated region
    $region30: #{tpu_custom_call.1} parent=1 // pred_check
      _
    $region31: #{tpu_custom_call.1} parent=1 // pred_check_branch
      %473 = sbr.rel (0) target = $region33
    $region32: #{tpu_custom_call.1} parent=1 // pred_region
      %475 = dma.done [#allocation4], 128
    $region33: #{tpu_custom_call.1} parent=1 // pred_fallthru
      _
    %476 = vsyncpa [#allocation3], 1
    %477 = vsyncpa [#allocation4], 1

// kernel: tpu_custom_call.1
$region0: #{tpu_custom_call.1}
  #allocation0 [shape = 'u32[]', space=smem, size = 0x4, offset = 0x4, fixed_abs, tag = 'smem constant byte address 0x4 - core index']
  #allocation1 [shape = 'u32[72,128]{1,0:T(1,128)}', space=vmem, size = 0x9000, scoped, tag = 'internal scratch']
  %s0 = inlined_call_operand.vmem [shape: f32[16,1], index: 0, kind: input, shape index: {}]
  %s1 = inlined_call_operand.vmem [shape: f32[1,128], index: 1, kind: input, shape index: {}]
  %s2 = inlined_call_operand.vmem [shape: f32[1,128], index: 2, kind: input, shape index: {}]
  %s3 = inlined_call_operand.hbm [shape: bf16[128,128], index: 3, kind: input, shape index: {}]
  %s4 = inlined_call_operand.vmem [shape: bf16[1,128], index: 4, kind: input, shape index: {}]
  %s5 = inlined_call_operand.hbm [shape: bf16[16,128], index: 5, kind: output, shape index: {}]
  %s6 = sld [smem:[#allocation0]]
  $region34: #{tpu_custom_call.1} parent=0
    _
  %s8 = ssub.s32 1, %s6
  %s9 = scalar_select 0, %s8, %s6
  $region1: #{tpu_custom_call.1} parent=0
    #allocation2 [shape = 'u8[32768]{0}', space=vmem, size = 0x8000, scoped, tag = 'input window, operand 3, single buffered']
    #allocation3 [shape = 's32[1]{0}', space=sflag, size = 0x4, scoped, tag = 'scoped memory for tpu_custom_call.1']
    #allocation4 [shape = 's32[1]{0}', space=sflag, size = 0x4, scoped, tag = 'scoped memory for tpu_custom_call.1']
    #allocation5 [shape = 'u8[4096]{0}', space=vmem, size = 0x1000, scoped, tag = 'output window, operand 0, single buffered']
    %10 = vsyncpa [#allocation3], 0
    %11 = vsyncpa [#allocation4], 0
    // Predicated region
    $region2: #{tpu_custom_call.1} parent=1 // pred_check
      _
    $region3: #{tpu_custom_call.1} parent=1 // pred_check_branch
      %13 = sbr.rel (0) target = $region5
    $region4: #{tpu_custom_call.1} parent=1 // pred_region
      _
    $region5: #{tpu_custom_call.1} parent=1 // pred_fallthru
      _
    // Predicated region
    $region6: #{tpu_custom_call.1} parent=1 // pred_check
      _
    $region7: #{tpu_custom_call.1} parent=1 // pred_check_branch
      %15 = sbr.rel (0) target = $region9
    $region8: #{tpu_custom_call.1} parent=1 // pred_region
      _
    $region9: #{tpu_custom_call.1} parent=1 // pred_fallthru
      _
    // Predicated region
    $region10: #{tpu_custom_call.1} parent=1 // pred_check
      _
    $region11: #{tpu_custom_call.1} parent=1 // pred_check_branch
      %17 = sbr.rel (0) target = $region13
    $region12: #{tpu_custom_call.1} parent=1 // pred_region
      _
    $region13: #{tpu_custom_call.1} parent=1 // pred_fallthru
      _
    // Predicated region
    $region14: #{tpu_custom_call.1} parent=1 // pred_check
      _
    $region15: #{tpu_custom_call.1} parent=1 // pred_check_branch
      %19 = sbr.rel (0) target = $region17
    $region16: #{tpu_custom_call.1} parent=1 // pred_region
      %21 = vsyncadd [#allocation3], 0
      %s22 = sshll.u32 %s3, 4
      %s23 = int_to_ptr.hbm [resolvable:$true] %s22
      %s24 = sshll.u32 [#allocation2], 4
      %s25 = int_to_ptr.vmem [resolvable:$true] %s24
      %30 = dma.hbm_to_vmem [thread:$0]  %s23, 1024, %s25, [#allocation3], 64, 64, 4
    $region17: #{tpu_custom_call.1} parent=1 // pred_fallthru
      _
    // Predicated region
    $region18: #{tpu_custom_call.1} parent=1 // pred_check
      _
    $region19: #{tpu_custom_call.1} parent=1 // pred_check_branch
      %32 = sbr.rel (0) target = $region21
    $region20: #{tpu_custom_call.1} parent=1 // pred_region
      _
    $region21: #{tpu_custom_call.1} parent=1 // pred_fallthru
      _
    // Predicated region
    $region22: #{tpu_custom_call.1} parent=1 // pred_check
      _
    $region23: #{tpu_custom_call.1} parent=1 // pred_check_branch
      %34 = sbr.rel (0) target = $region25
    $region24: #{tpu_custom_call.1} parent=1 // pred_region
      %36 = dma.done [#allocation3], 1024
    $region25: #{tpu_custom_call.1} parent=1 // pred_fallthru
      _
    %s37 = smul.u32 0, 16
    %s38 = scalar_lea.vmem %s0, %s37
    %v39 = vld [vmem:[%s38] sm:$0xff]
    %v40 = vld [vmem:[%s38 + $0x8] sm:$0xff]
    %v41 = vld [vmem:[%s1] sm:$0x1]
    %43 = vset.pattern.permute.xlu0 0
    %44 = vperm.xlu0 %43, %v39
    %v45 = vpop.permute.xlu0 %44
    %48 = vset.pattern.permute.xlu0 0
    %49 = vperm.xlu0 %48, %v40
    %v50 = vpop.permute.xlu0 %49
    %v53 = vperm.slane %v41, 0
    %v55 = vmul.f32 %v45, %v53
    %v56 = vmul.f32 %v50, %v53
    %v57 = vld [vmem:[%s2] sm:$0x1]
    %v59 = vperm.slane %v57, 0
    %v61 = vadd.f32 %v55, %v59
    %v62 = vadd.f32 %v56, %v59
    %v63 = vand.u32 2147483647, %v61
    %vm64 = vcmp.le.f32.partialorder %v63, 0.7853982
    %vm65 = vcmp.lt.s32.totalorder %v61, 0
    %v66 = vand.u32 %v61, 2139095040
    %v67 = vshrl.u32 %v66, 23
    %v68 = vsub.s32 %v67, 127
    %v69 = vand.u32 2147483647, %v61
    %v70 = vand.u32 %v69, 8388607
    %v71 = vor.u32 %v70, 8388608
    %v72 = vsub.s32 0, %v71
    %v73 = vadd.s32 %v68, 1
    %vm74 = vcmp.gt.s32.totalorder %v73, 0
    %v75 = vsel %vm74, %v73, 0
    %v76 = vshrl.u32 %v75, 5
    %v77 = vand.u32 %v75, 31
    %v78 = vsub.s32 32, %v77
    %v79 = vshrl.u32 683565275, %v78
    %v80 = vshll.u32 683565275, %v77
    %v81 = vshrl.u32 2475754826, %v78
    %v82 = vor.u32 %v80, %v81
    %v83 = vshll.u32 2475754826, %v77
    %v84 = vshrl.u32 2131351028, %v78
    %v85 = vor.u32 %v83, %v84
    %v86 = vshll.u32 2131351028, %v77
    %v87 = vshrl.u32 2102212464, %v78
    %v88 = vor.u32 %v86, %v87
    %v89 = vshll.u32 2102212464, %v77
    %v90 = vshrl.u32 920167782, %v78
    %v91 = vor.u32 %v89, %v90
    %v92 = vshll.u32 920167782, %v77
    %v93 = vshrl.u32 1326507024, %v78
    %v94 = vor.u32 %v92, %v93
    %vm95 = vcmp.lt.s32.totalorder %v76, 1
    %vm96 = vcmp.lt.s32.totalorder %v76, 2
    %vm97 = vcmp.lt.s32.totalorder %v76, 3
    %vm98 = vcmp.lt.s32.totalorder %v76, 4
    %v99 = vsel %vm95, %v79, %v82
    %v100 = vsel %vm98, %v88, 2102212464
    %v101 = vsel %vm97, %v85, %v100
    %v102 = vsel %vm96, %v99, %v101
    %v103 = vsel %vm95, %v82, %v85
    %v104 = vsel %vm98, %v91, 920167782
    %v105 = vsel %vm97, %v88, %v104
    %v106 = vsel %vm96, %v103, %v105
    %v107 = vsel %vm95, %v85, %v88
    %v108 = vsel %vm98, %v94, 1326507024
    %v109 = vsel %vm97, %v91, %v108
    %v110 = vsel %vm96, %v107, %v109
    %v111 = vshll.u32 %v71, 8
    %v112 = vand.u32 %v111, 65535
    %v113 = vshrl.u32 %v111, 16
    %v114 = vand.u32 %v110, 65535
    %v115 = vshrl.u32 %v110, 16
    %v116 = vmul.u32 %v112, %v114
    %v117 = vmul.u32 %v112, %v115
    %v118 = vmul.u32 %v113, %v114
    %v119 = vmul.u32 %v113, %v115
    %v120 = vshll.u32 %v117, 16
    %v121 = vshrl.u32 %v117, 16
    %v122 = vshll.u32 %v118, 16
    %v123 = vshrl.u32 %v118, 16
    %vm124 = vc.u32 %v116, %v120
    %v125 = vsel %vm124, 1, 0
    %v126 = vadd.s32 %v116, %v120
    %v127 = vadd.s32 %v119, %v125
    %vm128 = vc.u32 %v126, %v122
    %v129 = vsel %vm128, 1, 0
    %v130 = vadd.s32 %v126, %v122
    %v131 = vadd.s32 %v127, %v129
    %v132 = vadd.s32 %v131, %v121
    %v133 = vadd.s32 %v132, %v123
    %v134 = vand.u32 %v111, 65535
    %v135 = vshrl.u32 %v111, 16
    %v136 = vand.u32 %v106, 65535
    %v137 = vshrl.u32 %v106, 16
    %v138 = vmul.u32 %v134, %v136
    %v139 = vmul.u32 %v134, %v137
    %v140 = vmul.u32 %v135, %v136
    %v141 = vmul.u32 %v135, %v137
    %v142 = vshll.u32 %v139, 16
    %v143 = vshrl.u32 %v139, 16
    %v144 = vshll.u32 %v140, 16
    %v145 = vshrl.u32 %v140, 16
    %vm146 = vc.u32 %v138, %v142
    %v147 = vsel %vm146, 1, 0
    %v148 = vadd.s32 %v138, %v142
    %v149 = vadd.s32 %v141, %v147
    %vm150 = vc.u32 %v148, %v144
    %v151 = vsel %vm150, 1, 0
    %v152 = vadd.s32 %v148, %v144
    %v153 = vadd.s32 %v149, %v151
    %v154 = vadd.s32 %v153, %v143
    %v155 = vadd.s32 %v154, %v145
    %v156 = vmul.u32 %v111, %v102
    %v157 = vadd.s32 %v133, %v152
    %vm158 = vc.u32 %v133, %v152
    %v159 = vadd.s32 %v155, 1
    %v160 = vsel %vm158, %v159, %v155
    %v161 = vadd.s32 %v156, %v160
    %v162 = vadd.s32 %v161, 536870912
    %v163 = vshrl.u32 %v162, 30
    %v164 = vshll.u32 %v163, 30
    %v165 = vsub.s32 %v161, %v164
    %vm166 = vcmp.lt.s32.totalorder %v165, 0
    %v167 = vsub.s32 0, %v165
    %v168 = vsel %vm166, %v167, %v165
    %v169 = vclz %v168
    %v170 = vsub.s32 %v169, 2
    %vm171 = vcmp.gt.s32.totalorder 0, %v170
    %v172 = vsel %vm171, 0, %v170
    %v173 = vsub.s32 32, %v172
    %v174 = vshll.u32 %v165, %v172
    %v175 = vshrl.u32 %v157, %v173
    %v176 = vor.u32 %v174, %v175
    %v177 = vsub.s32 4294967266, %v172
    %v178 = vadd.s32 %v177, 127
    %v179 = vshll.u32 %v178, 23
    %v180 = vor.u32 4788187, %v179
    %v181 = vand.u32 2147483647, %v180
    %v183 = vcvt.s32.f32 %v176
    %v184 = vmul.f32 %v183, %v181
    %v185 = vxor.u32 %v184, 2147483648
    %v186 = vsel %vm65, %v185, %v184
    %v187 = vsub.s32 4, %v163
    %v188 = vsel %vm65, %v187, %v163
    %v189 = vsel %vm64, %v61, %v186
    %v190 = vsel %vm64, 0, %v188
    %v191 = vmul.f32 %v189, %v189
    %v192 = vmul.f32 %v191, -0.001358992
    %v193 = vadd.f32 %v192, 0.041655596
    %v194 = vmul.f32 %v191, %v193
    %v195 = vadd.f32 %v194, -0.4999988
    %v196 = vmul.f32 %v191, %v195
    %v197 = vadd.f32 1.0, %v196
    %v198 = vmul.f32 %v189, %v189
    %v199 = vmul.f32 %v198, -0.00019511016
    %v200 = vadd.f32 %v199, 0.008332121
    %v201 = vmul.f32 %v198, %v200
    %v202 = vadd.f32 %v201, -0.16666654
    %v203 = vmul.f32 %v198, %v202
    %v204 = vadd.f32 %v203, 1.0
    %v205 = vmul.f32 %v204, %v189
    %vm206 = vweird.f32 %v61
    %v207 = vadd.s32 %v190, 3
    %v208 = vand.u32 %v207, 3
    %vm209 = vcmp.lt.s32.totalorder %v208, 2
    %vm210 = vcmp.eq.s32.totalorder %v208, 0
    %v211 = vxor.u32 %v205, 2147483648
    %v212 = vsel %vm210, %v197, %v211
    %vm213 = vcmp.eq.s32.totalorder %v208, 2
    %v214 = vxor.u32 %v197, 2147483648
    %v215 = vsel %vm213, %v214, %v205
    %v216 = vsel %vm209, %v212, %v215
    %v217 = vsel %vm206, nan, %v216
    %v218 = vand.u32 2147483647, %v62
    %vm219 = vcmp.le.f32.partialorder %v218, 0.7853982
    %vm220 = vcmp.lt.s32.totalorder %v62, 0
    %v221 = vand.u32 %v62, 2139095040
    %v222 = vshrl.u32 %v221, 23
    %v223 = vsub.s32 %v222, 127
    %v224 = vand.u32 2147483647, %v62
    %v225 = vand.u32 %v224, 8388607
    %v226 = vor.u32 %v225, 8388608
    %v227 = vsub.s32 0, %v226
    %v228 = vadd.s32 %v223, 1
    %vm229 = vcmp.gt.s32.totalorder %v228, 0
    %v230 = vsel %vm229, %v228, 0
    %v231 = vshrl.u32 %v230, 5
    %v232 = vand.u32 %v230, 31
    %v233 = vsub.s32 32, %v232
    %v234 = vshrl.u32 683565275, %v233
    %v235 = vshll.u32 683565275, %v232
    %v236 = vshrl.u32 2475754826, %v233
    %v237 = vor.u32 %v235, %v236
    %v238 = vshll.u32 2475754826, %v232
    %v239 = vshrl.u32 2131351028, %v233
    %v240 = vor.u32 %v238, %v239
    %v241 = vshll.u32 2131351028, %v232
    %v242 = vshrl.u32 2102212464, %v233
    %v243 = vor.u32 %v241, %v242
    %v244 = vshll.u32 2102212464, %v232
    %v245 = vshrl.u32 920167782, %v233
    %v246 = vor.u32 %v244, %v245
    %v247 = vshll.u32 920167782, %v232
    %v248 = vshrl.u32 1326507024, %v233
    %v249 = vor.u32 %v247, %v248
    %vm250 = vcmp.lt.s32.totalorder %v231, 1
    %vm251 = vcmp.lt.s32.totalorder %v231, 2
    %vm252 = vcmp.lt.s32.totalorder %v231, 3
    %vm253 = vcmp.lt.s32.totalorder %v231, 4
    %v254 = vsel %vm250, %v234, %v237
    %v255 = vsel %vm253, %v243, 2102212464
    %v256 = vsel %vm252, %v240, %v255
    %v257 = vsel %vm251, %v254, %v256
    %v258 = vsel %vm250, %v237, %v240
    %v259 = vsel %vm253, %v246, 920167782
    %v260 = vsel %vm252, %v243, %v259
    %v261 = vsel %vm251, %v258, %v260
    %v262 = vsel %vm250, %v240, %v243
    %v263 = vsel %vm253, %v249, 1326507024
    %v264 = vsel %vm252, %v246, %v263
    %v265 = vsel %vm251, %v262, %v264
    %v266 = vshll.u32 %v226, 8
    %v267 = vand.u32 %v266, 65535
    %v268 = vshrl.u32 %v266, 16
    %v269 = vand.u32 %v265, 65535
    %v270 = vshrl.u32 %v265, 16
    %v271 = vmul.u32 %v267, %v269
    %v272 = vmul.u32 %v267, %v270
    %v273 = vmul.u32 %v268, %v269
    %v274 = vmul.u32 %v268, %v270
    %v275 = vshll.u32 %v272, 16
    %v276 = vshrl.u32 %v272, 16
    %v277 = vshll.u32 %v273, 16
    %v278 = vshrl.u32 %v273, 16
    %vm279 = vc.u32 %v271, %v275
    %v280 = vsel %vm279, 1, 0
    %v281 = vadd.s32 %v271, %v275
    %v282 = vadd.s32 %v274, %v280
    %vm283 = vc.u32 %v281, %v277
    %v284 = vsel %vm283, 1, 0
    %v285 = vadd.s32 %v281, %v277
    %v286 = vadd.s32 %v282, %v284
    %v287 = vadd.s32 %v286, %v276
    %v288 = vadd.s32 %v287, %v278
    %v289 = vand.u32 %v266, 65535
    %v290 = vshrl.u32 %v266, 16
    %v291 = vand.u32 %v261, 65535
    %v292 = vshrl.u32 %v261, 16
    %v293 = vmul.u32 %v289, %v291
    %v294 = vmul.u32 %v289, %v292
    %v295 = vmul.u32 %v290, %v291
    %v296 = vmul.u32 %v290, %v292
    %v297 = vshll.u32 %v294, 16
    %v298 = vshrl.u32 %v294, 16
    %v299 = vshll.u32 %v295, 16
    %v300 = vshrl.u32 %v295, 16
    %vm301 = vc.u32 %v293, %v297
    %v302 = vsel %vm301, 1, 0
    %v303 = vadd.s32 %v293, %v297
    %v304 = vadd.s32 %v296, %v302
    %vm305 = vc.u32 %v303, %v299
    %v306 = vsel %vm305, 1, 0
    %v307 = vadd.s32 %v303, %v299
    %v308 = vadd.s32 %v304, %v306
    %v309 = vadd.s32 %v308, %v298
    %v310 = vadd.s32 %v309, %v300
    %v311 = vmul.u32 %v266, %v257
    %v312 = vadd.s32 %v288, %v307
    %vm313 = vc.u32 %v288, %v307
    %v314 = vadd.s32 %v310, 1
    %v315 = vsel %vm313, %v314, %v310
    %v316 = vadd.s32 %v311, %v315
    %v317 = vadd.s32 %v316, 536870912
    %v318 = vshrl.u32 %v317, 30
    %v319 = vshll.u32 %v318, 30
    %v320 = vsub.s32 %v316, %v319
    %vm321 = vcmp.lt.s32.totalorder %v320, 0
    %v322 = vsub.s32 0, %v320
    %v323 = vsel %vm321, %v322, %v320
    %v324 = vclz %v323
    %v325 = vsub.s32 %v324, 2
    %vm326 = vcmp.gt.s32.totalorder 0, %v325
    %v327 = vsel %vm326, 0, %v325
    %v328 = vsub.s32 32, %v327
    %v329 = vshll.u32 %v320, %v327
    %v330 = vshrl.u32 %v312, %v328
    %v331 = vor.u32 %v329, %v330
    %v332 = vsub.s32 4294967266, %v327
    %v333 = vadd.s32 %v332, 127
    %v334 = vshll.u32 %v333, 23
    %v335 = vor.u32 4788187, %v334
    %v336 = vand.u32 2147483647, %v335
    %v338 = vcvt.s32.f32 %v331
    %v339 = vmul.f32 %v338, %v336
    %v340 = vxor.u32 %v339, 2147483648
    %v341 = vsel %vm220, %v340, %v339
    %v342 = vsub.s32 4, %v318
    %v343 = vsel %vm220, %v342, %v318
    %v344 = vsel %vm219, %v62, %v341
    %v345 = vsel %vm219, 0, %v343
    %v346 = vmul.f32 %v344, %v344
    %v347 = vmul.f32 %v346, -0.001358992
    %v348 = vadd.f32 %v347, 0.041655596
    %v349 = vmul.f32 %v346, %v348
    %v350 = vadd.f32 %v349, -0.4999988
    %v351 = vmul.f32 %v346, %v350
    %v352 = vadd.f32 1.0, %v351
    %v353 = vmul.f32 %v344, %v344
    %v354 = vmul.f32 %v353, -0.00019511016
    %v355 = vadd.f32 %v354, 0.008332121
    %v356 = vmul.f32 %v353, %v355
    %v357 = vadd.f32 %v356, -0.16666654
    %v358 = vmul.f32 %v353, %v357
    %v359 = vadd.f32 %v358, 1.0
    %v360 = vmul.f32 %v359, %v344
    %vm361 = vweird.f32 %v62
    %v362 = vadd.s32 %v345, 3
    %v363 = vand.u32 %v362, 3
    %vm364 = vcmp.lt.s32.totalorder %v363, 2
    %vm365 = vcmp.eq.s32.totalorder %v363, 0
    %v366 = vxor.u32 %v360, 2147483648
    %v367 = vsel %vm365, %v352, %v366
    %vm368 = vcmp.eq.s32.totalorder %v363, 2
    %v369 = vxor.u32 %v352, 2147483648
    %v370 = vsel %vm368, %v369, %v360
    %v371 = vsel %vm364, %v367, %v370
    %v372 = vsel %vm361, nan, %v371
    %v373 = vpack.c.bf16 %v372, %v217
    %v374 = vld [vmem:[#allocation2] sm:$0xf]
    %v375 = vld [vmem:[#allocation2 + $0x4] sm:$0xf]
    %v376 = vld [vmem:[#allocation2 + $0x8] sm:$0xf]
    %v377 = vld [vmem:[#allocation2 + $0xc] sm:$0xf]
    %v378 = vld [vmem:[#allocation2 + $0x10] sm:$0xf]
    %v379 = vld [vmem:[#allocation2 + $0x14] sm:$0xf]
    %v380 = vld [vmem:[#allocation2 + $0x18] sm:$0xf]
    %v381 = vld [vmem:[#allocation2 + $0x1c] sm:$0xf]
    %v382 = vld [vmem:[#allocation2 + $0x20] sm:$0xf]
    %v383 = vld [vmem:[#allocation2 + $0x24] sm:$0xf]
    %v384 = vld [vmem:[#allocation2 + $0x28] sm:$0xf]
    %v385 = vld [vmem:[#allocation2 + $0x2c] sm:$0xf]
    %v386 = vld [vmem:[#allocation2 + $0x30] sm:$0xf]
    %v387 = vld [vmem:[#allocation2 + $0x34] sm:$0xf]
    %v388 = vld [vmem:[#allocation2 + $0x38] sm:$0xf]
    %v389 = vld [vmem:[#allocation2 + $0x3c] sm:$0xf]
    %v390 = vld [vmem:[%s4] sm:$0x1]
    %v391 = vunpack.c.l.bf16 %v390
    %v392 = vperm.slane %v391, 0
    %v409 = vunpack.c.l.b16 %v374
    %v410 = vunpack.c.l.b16 %v375
    %v411 = vunpack.c.l.b16 %v376
    %v412 = vunpack.c.l.b16 %v377
    %v413 = vunpack.c.l.b16 %v378
    %v414 = vunpack.c.l.b16 %v379
    %v415 = vunpack.c.l.b16 %v380
    %v416 = vunpack.c.l.b16 %v381
    %v417 = vunpack.c.l.b16 %v382
    %v418 = vunpack.c.l.b16 %v383
    %v419 = vunpack.c.l.b16 %v384
    %v420 = vunpack.c.l.b16 %v385
    %v421 = vunpack.c.l.b16 %v386
    %v422 = vunpack.c.l.b16 %v387
    %v423 = vunpack.c.l.b16 %v388
    %v424 = vunpack.c.l.b16 %v389
    %v425 = vpack.c.b16 %v410, %v409
    %v426 = vpack.c.b16 %v412, %v411
    %v427 = vpack.c.b16 %v414, %v413
    %v428 = vpack.c.b16 %v416, %v415
    %v429 = vpack.c.b16 %v418, %v417
    %v430 = vpack.c.b16 %v420, %v419
    %v431 = vpack.c.b16 %v422, %v421
    %v432 = vpack.c.b16 %v424, %v423
    %441 = vmatpush.bf16.msra.mxu0 %v432
    %442 = vmatpush.bf16.msra.mxu0 %v431
    %443 = vmatpush.bf16.msra.mxu0 %v430
    %444 = vmatpush.bf16.msra.mxu0 %v429
    %445 = vmatpush.bf16.msra.mxu0 %v428
    %446 = vmatpush.bf16.msra.mxu0 %v427
    %447 = vmatpush.bf16.msra.mxu0 %v426
    %448 = vmatpush.bf16.msra.mxu0 %v425
    %449 = vmatmul.bf16.gmra.mxu0 %v373
    %v450 = vpop.f32.mrf.mxu0
    %v451 = vadd.f32 %v392, %v450
    %v452 = vpop.f32.mrf.mxu0
    %v453 = vadd.f32 %v392, %v452
    %454 = vdwg.mxu0
    %v455 = vpack.c.bf16 %v451, %v451
    %v456 = vpack.c.bf16 %v453, %v453
    %457 = vst [vmem:[#allocation5] sm:$0xf] %v455
    %458 = vst [vmem:[#allocation5 + $0x4] sm:$0xf] %v456
    // Predicated region
    $region26: #{tpu_custom_call.1} parent=1 // pred_check
      _
    $region27: #{tpu_custom_call.1} parent=1 // pred_check_branch
      %460 = sbr.rel (0) target = $region29
    $region28: #{tpu_custom_call.1} parent=1 // pred_region
      %462 = vsyncadd [#allocation4], 0
      %s463 = sshll.u32 [#allocation5], 4
      %s464 = int_to_ptr.vmem [resolvable:$true] %s463
      %s465 = sshll.u32 %s5, 4
      %s466 = int_to_ptr.hbm [resolvable:$true] %s465
      %471 = dma.vmem_to_hbm [thread:$0]  %s464, 128, %s466, [#allocation4], 64, 64, 4
    $region29: #{tpu_custom_call.1} parent=1 // pred_fallthru
      _
    // Predicated region
    $region30: #{tpu_custom_call.1} parent=1 // pred_check
      _
    $region31: #{tpu_custom_call.1} parent=1 // pred_check_branch
      %473 = sbr.rel (0) target = $region33
    $region32: #{tpu_custom_call.1} parent=1 // pred_region
      %475 = dma.done [#allocation4], 128
    $region33: #{tpu_custom_call.1} parent=1 // pred_fallthru
      _
    %476 = vsyncpa [#allocation3], 1
    %477 = vsyncpa [#allocation4], 1

</llo_original>
